<compile_context>
chip_gen: v6e
topology: v6e:2x2x1
jax: 0.10.0
libtpu: 0.0.40
codegen_flags: <defaults>
</compile_context>

<pallas_src>
import jax
import jax.numpy as jnp
from jax.experimental import pallas as pl
from jax.experimental.pallas import tpu as pltpu


# ---------------------------------------------------------------------------
# Default forward: abstract no-op -> identity, no device work at all.
# ---------------------------------------------------------------------------
def base_ssl_forward(x: jax.Array) -> jax.Array:
    """BaseSSL.forward is `pass`; the cheapest faithful identity is `return x`.

    (A Pallas aliased-output kernel would only be zero-traffic if the caller
    donates `x`; otherwise XLA inserts a defensive copy plus a custom-call
    launch, so returning the input directly is strictly better.)
    """
    return x


# ---------------------------------------------------------------------------
# Materialized forward: fresh output buffer via direct HBM->HBM DMA.
# ---------------------------------------------------------------------------
_MIN_BYTES_PER_DMA = 8 * 1024 * 1024  # don't bother splitting below ~8 MiB/chunk


def _pick_num_chunks(x: jax.Array) -> int:
    """Split the leading dim into a few large chunks so >1 DMA is in flight."""
    if x.ndim == 0 or x.size == 0:
        return 1
    nbytes = x.size * jnp.dtype(x.dtype).itemsize
    lead = x.shape[0]
    for n in (4, 2):
        if lead % n == 0 and (nbytes // n) >= _MIN_BYTES_PER_DMA:
            return n
    return 1


def _make_dma_copy_kernel(n_chunks: int, chunk: int):
    """Kernel body: pure HBM->HBM DMA copy, no VMEM staging, no compute."""

    def kernel(x_ref, o_ref, sem):
        if n_chunks == 1:
            cp = pltpu.make_async_copy(x_ref, o_ref, sem.at[0])
            cp.start()
            cp.wait()
        else:
            copies = []
            for i in range(n_chunks):
                sl = pl.ds(i * chunk, chunk)
                copies.append(
                    pltpu.make_async_copy(x_ref.at[sl], o_ref.at[sl], sem.at[i])
                )
            # Issue all DMAs first (multiple in flight), then wait on each.
            for cp in copies:
                cp.start()
            for cp in copies:
                cp.wait()

    return kernel


def base_ssl_forward_materialized(x: jax.Array) -> jax.Array:
    """Identity forward returning a *new* buffer via direct HBM->HBM DMA.

    Both refs live in HBM (memory_space=pl.ANY); the copy never round-trips
    through VMEM, so there is no grid-step overhead, no vld/vst bundle work,
    no VMEM footprint, and no shape/lane-density restriction.
    """
    n_chunks = _pick_num_chunks(x)
    chunk = (x.shape[0] // n_chunks) if (x.ndim >= 1 and n_chunks > 1) else 0

    return pl.pallas_call(
        _make_dma_copy_kernel(n_chunks, chunk),
        out_shape=jax.ShapeDtypeStruct(x.shape, x.dtype),
        in_specs=[pl.BlockSpec(memory_space=pl.ANY)],
        out_specs=pl.BlockSpec(memory_space=pl.ANY),
        scratch_shapes=[pltpu.SemaphoreType.DMA((n_chunks,))],
    )(x)


# TODO(synk): BaseSSL's transforms / samplers / prepare_data / dataloaders /
# get_ckpt / load are CPU-side data-pipeline & checkpoint methods with no
# tensor compute; there is no Pallas equivalent.


if __name__ == "__main__":
    key = jax.random.PRNGKey(0)
    # Small CIFAR-like NCHW input consistent with the (abstract) SSL module.
    x = jax.random.normal(key, (2, 4, 16, 16), dtype=jnp.float32)

    # Default no-op forward: identity with zero device work.
    y = base_ssl_forward(x)
    assert y is x

    # Materialized forward: fresh buffer produced by a direct HBM->HBM DMA.
    y2 = jax.block_until_ready(base_ssl_forward_materialized(x))
    assert y2.shape == x.shape and y2.dtype == x.dtype
    assert jnp.array_equal(y2, x)

    print("KERNEL_OK")
</pallas_src>

<mosaic_0001>
module attributes {stable_mosaic.version = 11 : i64} {
  func.func @kernel(%arg0: memref<2x4x16x16xf32, #tpu.memory_space<any>>, %arg1: memref<2x4x16x16xf32, #tpu.memory_space<any>>, %arg2: memref<1x!tpu.dma_semaphore, #tpu.memory_space<semaphore_mem>>) attributes {dimension_semantics = [], scalar_prefetch = 0 : i64, scratch_operands = 1 : i64, tpu.core_type = #tpu.core_type<tc>} {
    %c0_i32 = arith.constant 0 : i32
    %0 = tpu.memref_slice %arg2[%c0_i32] : memref<1x!tpu.dma_semaphore, #tpu.memory_space<semaphore_mem>> -> memref<1x!tpu.dma_semaphore, #tpu.memory_space<semaphore_mem>>
    %1 = tpu.memref_squeeze %0 : memref<1x!tpu.dma_semaphore, #tpu.memory_space<semaphore_mem>> -> memref<!tpu.dma_semaphore, #tpu.memory_space<semaphore_mem>>
    tpu.enqueue_dma source(%arg0 : memref<2x4x16x16xf32, #tpu.memory_space<any>>) target(%arg1 : memref<2x4x16x16xf32, #tpu.memory_space<any>>) target_semaphore(%1 : memref<!tpu.dma_semaphore, #tpu.memory_space<semaphore_mem>>)
    %c0_i32_0 = arith.constant 0 : i32
    %2 = tpu.memref_slice %arg2[%c0_i32_0] : memref<1x!tpu.dma_semaphore, #tpu.memory_space<semaphore_mem>> -> memref<1x!tpu.dma_semaphore, #tpu.memory_space<semaphore_mem>>
    %3 = tpu.memref_squeeze %2 : memref<1x!tpu.dma_semaphore, #tpu.memory_space<semaphore_mem>> -> memref<!tpu.dma_semaphore, #tpu.memory_space<semaphore_mem>>
    tpu.wait_dma2 semaphore(%3 : memref<!tpu.dma_semaphore, #tpu.memory_space<semaphore_mem>>) src(%arg0 : memref<2x4x16x16xf32, #tpu.memory_space<any>>) dst(%arg1 : memref<2x4x16x16xf32, #tpu.memory_space<any>>)
    return
  }
}

</mosaic_0001>

<llo_original>
// kernel: tpu_custom_call.1
$region0: #{tpu_custom_call.1}
  #allocation0 [shape = 'u32[]', space=smem, size = 0x4, offset = 0x4, fixed_abs, tag = 'smem constant byte address 0x4 - core index']
  #allocation1 [shape = 'u32[144,128]{1,0:T(1,128)}', space=vmem, size = 0x12000, scoped, tag = 'internal scratch']
  #allocation2 [shape = 's32[1]{0}', space=sflag, size = 0x4, scoped, tag = 'scratch operand']
  #allocation3 [shape = 's32[]', space=sflag, size = 0x4, offset = 0, fixed_abs, tag = 'sflag constant byte address 0x0 - dummy sync flag']
  #allocation4 [shape = 'u32[0]{0}', space=smem, size = 0, offset = 0, fixed_abs, tag = 'smem constant byte address 0x0 - null']
  %s0 = inlined_call_operand.hbm [shape: f32[2,4,16,16], index: 0, kind: input, shape index: {}]
  %s1 = inlined_call_operand.hbm [shape: f32[2,4,16,16], index: 1, kind: output, shape index: {}]
  %s2 = sld [smem:[#allocation0]]
  $region2: #{tpu_custom_call.1} parent=0
    _
  %s4 = ssub.s32 1, %s2
  %s5 = scalar_select 0, %s4, %s2
  %s7 = sshll.u32 1, 14
  %s8 = sxor.u32 4294967295, %s7
  %12 = dma.general %s0, 2048, %s1, [#allocation2], 131072, [#allocation4], 0, 0
  %s13 = smul.u32 2, 4
  %s14 = smul.u32 %s13, 16
  %s15 = smul.u32 %s14, 1
  %s16 = sshll.u32 %s15, 4
  %17 = dma.done [#allocation2], %s16
  %18 = vsyncmov [#allocation2]
  %s19 = vpop.sfrf %18
  %p20 = scmp.eq.s32.totalorder %s19, 0
  %p21 = pneg %p20
  %23 = shalt.err (%p21)

</llo_original>
